<compile_context>
chip_gen: v7x
topology: tpu7x:2x2x1
jax: 0.10.0
libtpu: 0.0.40
codegen_flags: <defaults>
</compile_context>

<pallas_src>
import math

import jax
import jax.numpy as jnp
import numpy as np
from jax.experimental import pallas as pl
from jax.experimental.pallas import tpu as pltpu


def _gelu_exact(x):
    # Matches torch.nn.functional.gelu default (approximate='none').
    return 0.5 * x * (1.0 + jax.lax.erf(x * (1.0 / math.sqrt(2.0))))


def _fused_resnet_kernel(x_ref, w_ref, b_ref, o_ref):
    """Single-step fused block; everything lane-dense (minor dim = B*W*C = 128).

    x_ref : (H, B*W*C)           input, lane index = b*W*C + w*C + c
    w_ref : (2, 3*B*W*C, B*W*C)  K-stacked banded conv weights (conv1, conv2)
    b_ref : (2, 1, B*W*C)        biases tiled across B*W
    o_ref : (H, B*W*C)           output
    """
    f32 = jnp.float32
    H = x_ref.shape[0]
    v = x_ref[...]                                              # one aligned (H, 128) load
    rows = jax.lax.broadcasted_iota(jnp.int32, v.shape, 0)
    top = rows == 0
    bot = rows == H - 1

    def conv3x3_gelu(t, layer):
        # "same" 3x3 conv == [row_above(t) | t | row_below(t)] @ W_stack  (one MXU op).
        # W_stack folds the 3 width taps, the channel contraction and the per-batch
        # block-diagonal into a K = 3*B*W*C banded slab (zero width padding is encoded in
        # the band structure); zero row padding is the one-row mask after the XLU roll.
        t_up = jnp.where(top, 0.0, pltpu.roll(t, 1, 0))         # src row h-1  (kh = 0)
        t_dn = jnp.where(bot, 0.0, pltpu.roll(t, H - 1, 0))     # src row h+1  (kh = 2)
        stacked = jnp.concatenate([t_up, t, t_dn], axis=-1)     # (H, 3*B*W*C), lane-aligned
        acc = jnp.dot(stacked, w_ref[layer], preferred_element_type=f32)
        return _gelu_exact(acc + b_ref[layer])                  # bias added once, (1, B*W*C)

    y1 = conv3x3_gelu(v, 0)                                     # conv1 result stays in vregs
    y2 = conv3x3_gelu(y1, 1)
    o_ref[...] = (y2 + v).astype(o_ref.dtype)                   # residual + unmasked store


def _stacked_banded_weights(w_hwio, B, W):
    """(3, 3, Cin, Cout) HWIO -> (3*B*W*Cin, B*W*Cout) K-stacked, batch-block-diag slab.

    Per row tap kh:
      slab_kh[w_src*Cin + ci, w*Cout + co] = w[kh, kw, ci, co] with w_src = w + kw - 1
    (out-of-range columns dropped == zero width padding), then kron(eye(B), .) makes it
    block-diagonal over the batch fold, and the 3 taps are stacked along K in the order
    [row_above | center | row_below] to match the kernel's lane-concat. Host-side only.
    """
    eye_b = jnp.eye(B, dtype=w_hwio.dtype)
    slabs = []
    for kh in range(3):
        slab = 0.0
        for kw in range(3):                                     # fold width taps + channels
            slab = slab + jnp.kron(jnp.eye(W, k=1 - kw, dtype=w_hwio.dtype), w_hwio[kh, kw])
        slabs.append(jnp.kron(eye_b, slab))                     # batch fold -> block-diag
    return jnp.concatenate(slabs, axis=0)                       # (3*B*W*Cin, B*W*Cout)


@jax.jit
def resnet_forward(x_nchw, params):
    """out = gelu(conv2(gelu(conv1(x)))) + x   (NCHW in / NCHW out)."""
    B, C, H, W = x_nchw.shape
    BWC = B * W * C
    dt = x_nchw.dtype

    # Layout glue (reshape/transpose only): NCHW -> lane-dense (H, B*W*C) slab.
    # TODO(synk): accept the lane-dense layout at the API boundary (or relayout in-kernel)
    # to drop these two standalone transposes in this overhead-dominated regime.
    x_lane = jnp.transpose(x_nchw, (2, 0, 3, 1)).reshape(H, BWC)

    # Host-side weight/bias pre-transforms (data placement only; no math leaves the kernel).
    w_all = jnp.stack([_stacked_banded_weights(params["w1"], B, W),
                       _stacked_banded_weights(params["w2"], B, W)])          # (2, 3*BWC, BWC)
    b_all = jnp.stack([jnp.tile(params["b1"], B * W),
                       jnp.tile(params["b2"], B * W)]).reshape(2, 1, BWC).astype(dt)

    # No grid, no BlockSpecs: one step, every operand is a full array resident in VMEM
    # (~400 KiB working set). Fits the default scoped VMEM on v5e/v6e/v7x with huge margin.
    out_lane = pl.pallas_call(
        _fused_resnet_kernel,
        out_shape=jax.ShapeDtypeStruct((H, BWC), dt),
    )(x_lane, w_all, b_all)

    # TODO(synk): for large H add a row-tiled grid axis (2-row halo for the fused second
    # conv); size that tile for v7x's 64 MiB physical / 32 MiB scoped VMEM, not v6e's 128 MiB.
    return jnp.transpose(out_lane.reshape(H, B, W, C), (1, 3, 0, 2))


def resnet_reference(x_nchw, params):
    """Pure-JAX reference (lax.conv) for correctness checking."""
    x = jnp.transpose(x_nchw, (0, 2, 3, 1))

    def conv(inp, w, b):
        y = jax.lax.conv_general_dilated(
            inp, w, window_strides=(1, 1), padding="SAME",
            dimension_numbers=("NHWC", "HWIO", "NHWC"))
        return _gelu_exact(y + b)

    o1 = conv(x, params["w1"], params["b1"])
    o2 = conv(o1, params["w2"], params["b2"]) + x
    return jnp.transpose(o2, (0, 3, 1, 2))


if __name__ == "__main__":
    B, C, H, W = 2, 4, 16, 16

    key = jax.random.PRNGKey(0)
    kx, kw1, kb1, kw2, kb2 = jax.random.split(key, 5)

    x = jax.random.normal(kx, (B, C, H, W), dtype=jnp.float32)

    # Deterministic init mirroring nn.Conv2d defaults (uniform(-1/sqrt(fan_in), ...)).
    fan_in = C * 3 * 3
    bound = 1.0 / math.sqrt(fan_in)
    params = {
        "w1": jax.random.uniform(kw1, (3, 3, C, C), jnp.float32, -bound, bound),
        "b1": jax.random.uniform(kb1, (C,), jnp.float32, -bound, bound),
        "w2": jax.random.uniform(kw2, (3, 3, C, C), jnp.float32, -bound, bound),
        "b2": jax.random.uniform(kb2, (C,), jnp.float32, -bound, bound),
    }

    out = jax.block_until_ready(resnet_forward(x, params))
    ref = jax.block_until_ready(resnet_reference(x, params))

    assert out.shape == (B, C, H, W), out.shape
    if not np.allclose(np.asarray(out), np.asarray(ref), rtol=1e-4, atol=1e-4):
        raise AssertionError("Pallas output does not match reference")

    print("KERNEL_OK")
</pallas_src>

<mosaic_0001>
module attributes {stable_mosaic.version = 11 : i64} {
  func.func @_fused_resnet_kernel(%arg0: memref<16x128xf32, #tpu.memory_space<vmem>>, %arg1: memref<2x384x128xf32, #tpu.memory_space<vmem>>, %arg2: memref<2x1x128xf32, #tpu.memory_space<vmem>>, %arg3: memref<16x128xf32, #tpu.memory_space<vmem>>) attributes {dimension_semantics = [], scalar_prefetch = 0 : i64, scratch_operands = 0 : i64, tpu.core_type = #tpu.core_type<tc>} {
    %c0 = arith.constant 0 : index
    %c0_0 = arith.constant 0 : index
    %0 = vector.load %arg0[%c0, %c0_0] : memref<16x128xf32, #tpu.memory_space<vmem>>, vector<16x128xf32>
    %1 = tpu.iota {dimensions = array<i32: 0>} : vector<16x128xi32>
    %c0_i32 = arith.constant 0 : i32
    %2 = vector.broadcast %c0_i32 : i32 to vector<16x128xi32>
    %3 = arith.cmpi eq, %1, %2 : vector<16x128xi32>
    %c15_i32 = arith.constant 15 : i32
    %4 = vector.broadcast %c15_i32 : i32 to vector<16x128xi32>
    %5 = arith.cmpi eq, %1, %4 : vector<16x128xi32>
    %c1_i32 = arith.constant 1 : i32
    %6 = tpu.dynamic_rotate %0 by %c1_i32 dim 0 : vector<16x128xf32>, i32 -> vector<16x128xf32>
    %cst = arith.constant 0.000000e+00 : f32
    %7 = vector.broadcast %cst : f32 to vector<16x128xf32>
    %8 = arith.select %3, %7, %6 : vector<16x128xi1>, vector<16x128xf32>
    %c15_i32_1 = arith.constant 15 : i32
    %9 = tpu.dynamic_rotate %0 by %c15_i32_1 dim 0 : vector<16x128xf32>, i32 -> vector<16x128xf32>
    %cst_2 = arith.constant 0.000000e+00 : f32
    %10 = vector.broadcast %cst_2 : f32 to vector<16x128xf32>
    %11 = arith.select %5, %10, %9 : vector<16x128xi1>, vector<16x128xf32>
    %12 = tpu.concatenate %8, %0, %11 in 1 : vector<16x128xf32>, vector<16x128xf32>, vector<16x128xf32> -> vector<16x384xf32>
    %c0_3 = arith.constant 0 : index
    %c0_4 = arith.constant 0 : index
    %c0_5 = arith.constant 0 : index
    %13 = vector.load %arg1[%c0_3, %c0_4, %c0_5] : memref<2x384x128xf32, #tpu.memory_space<vmem>>, vector<1x384x128xf32>
    %14 = vector.shape_cast %13 : vector<1x384x128xf32> to vector<384x128xf32>
    %cst_6 = arith.constant dense<0.000000e+00> : vector<16x128xf32>
    %15 = tpu.matmul %12, %14, %cst_6 {dimension_numbers = #tpu.dot_dimension_numbers<[1], [0], [0], [1], [0, 0, 1, 1], [], []>} : vector<16x384xf32>, vector<384x128xf32>, vector<16x128xf32> -> vector<16x128xf32>
    %c0_7 = arith.constant 0 : index
    %c0_8 = arith.constant 0 : index
    %c0_9 = arith.constant 0 : index
    %16 = vector.load %arg2[%c0_7, %c0_8, %c0_9] : memref<2x1x128xf32, #tpu.memory_space<vmem>>, vector<1x1x128xf32>
    %17 = vector.shape_cast %16 : vector<1x1x128xf32> to vector<1x128xf32>
    %18 = vector.broadcast %17 : vector<1x128xf32> to vector<16x128xf32>
    %19 = arith.addf %15, %18 : vector<16x128xf32>
    %cst_10 = arith.constant 5.000000e-01 : f32
    %20 = vector.broadcast %cst_10 : f32 to vector<16x128xf32>
    %21 = arith.mulf %20, %19 : vector<16x128xf32>
    %cst_11 = arith.constant 0.707106769 : f32
    %22 = vector.broadcast %cst_11 : f32 to vector<16x128xf32>
    %23 = arith.mulf %19, %22 : vector<16x128xf32>
    %24 = math.erf %23 : vector<16x128xf32>
    %cst_12 = arith.constant 1.000000e+00 : f32
    %25 = vector.broadcast %cst_12 : f32 to vector<16x128xf32>
    %26 = arith.addf %25, %24 : vector<16x128xf32>
    %27 = arith.mulf %21, %26 : vector<16x128xf32>
    %c1_i32_13 = arith.constant 1 : i32
    %28 = tpu.dynamic_rotate %27 by %c1_i32_13 dim 0 : vector<16x128xf32>, i32 -> vector<16x128xf32>
    %cst_14 = arith.constant 0.000000e+00 : f32
    %29 = vector.broadcast %cst_14 : f32 to vector<16x128xf32>
    %30 = arith.select %3, %29, %28 : vector<16x128xi1>, vector<16x128xf32>
    %c15_i32_15 = arith.constant 15 : i32
    %31 = tpu.dynamic_rotate %27 by %c15_i32_15 dim 0 : vector<16x128xf32>, i32 -> vector<16x128xf32>
    %cst_16 = arith.constant 0.000000e+00 : f32
    %32 = vector.broadcast %cst_16 : f32 to vector<16x128xf32>
    %33 = arith.select %5, %32, %31 : vector<16x128xi1>, vector<16x128xf32>
    %34 = tpu.concatenate %30, %27, %33 in 1 : vector<16x128xf32>, vector<16x128xf32>, vector<16x128xf32> -> vector<16x384xf32>
    %c1 = arith.constant 1 : index
    %c0_17 = arith.constant 0 : index
    %c0_18 = arith.constant 0 : index
    %35 = vector.load %arg1[%c1, %c0_17, %c0_18] : memref<2x384x128xf32, #tpu.memory_space<vmem>>, vector<1x384x128xf32>
    %36 = vector.shape_cast %35 : vector<1x384x128xf32> to vector<384x128xf32>
    %cst_19 = arith.constant dense<0.000000e+00> : vector<16x128xf32>
    %37 = tpu.matmul %34, %36, %cst_19 {dimension_numbers = #tpu.dot_dimension_numbers<[1], [0], [0], [1], [0, 0, 1, 1], [], []>} : vector<16x384xf32>, vector<384x128xf32>, vector<16x128xf32> -> vector<16x128xf32>
    %c1_20 = arith.constant 1 : index
    %c0_21 = arith.constant 0 : index
    %c0_22 = arith.constant 0 : index
    %38 = vector.load %arg2[%c1_20, %c0_21, %c0_22] : memref<2x1x128xf32, #tpu.memory_space<vmem>>, vector<1x1x128xf32>
    %39 = vector.shape_cast %38 : vector<1x1x128xf32> to vector<1x128xf32>
    %40 = vector.broadcast %39 : vector<1x128xf32> to vector<16x128xf32>
    %41 = arith.addf %37, %40 : vector<16x128xf32>
    %cst_23 = arith.constant 5.000000e-01 : f32
    %42 = vector.broadcast %cst_23 : f32 to vector<16x128xf32>
    %43 = arith.mulf %42, %41 : vector<16x128xf32>
    %cst_24 = arith.constant 0.707106769 : f32
    %44 = vector.broadcast %cst_24 : f32 to vector<16x128xf32>
    %45 = arith.mulf %41, %44 : vector<16x128xf32>
    %46 = math.erf %45 : vector<16x128xf32>
    %cst_25 = arith.constant 1.000000e+00 : f32
    %47 = vector.broadcast %cst_25 : f32 to vector<16x128xf32>
    %48 = arith.addf %47, %46 : vector<16x128xf32>
    %49 = arith.mulf %43, %48 : vector<16x128xf32>
    %50 = arith.addf %49, %0 : vector<16x128xf32>
    %c0_26 = arith.constant 0 : index
    %c0_27 = arith.constant 0 : index
    %51 = vector.load %arg3[%c0_26, %c0_27] : memref<16x128xf32, #tpu.memory_space<vmem>>, vector<16x128xf32>
    tpu.vector_store %arg3[%c0_26, %c0_27], %50 {strides = array<i32>} : memref<16x128xf32, #tpu.memory_space<vmem>>, vector<16x128xf32>,
    return
  }
}

</mosaic_0001>

<llo_original>
// kernel: tile.13
$region0: #{tile.13}
  #allocation0 [shape = 's32[1]{0}', space=sflag, size = 0x4, scoped, tag = 'scoped memory for tile.13']
  %s0 = inlined_call_operand.vmem [shape: f32[4], index: 0, kind: input, shape index: {}]
  %s1 = inlined_call_operand.vmem [shape: f32[32,4], index: 1, kind: output, shape index: {}]
  // Predicated region
  $region2: #{tile.13} parent=0 // pred_check
    _
  $region3: #{tile.13} parent=0 // pred_check_branch
    %3 = sbr.rel (0) target = $region5
  $region4: #{tile.13} parent=0 // pred_region
    _
  $region5: #{tile.13} parent=0 // pred_fallthru
    _
  %v4 = vld [vmem:[%s0] ss:$0 sm:$0xff]
  %5 = vst [vmem:[%s1] sm:$0xff] %v4
  %s6 = scalar_lea.vmem %s1, 8
  %7 = vst [vmem:[%s6] sm:$0xff] %v4
  %s8 = scalar_lea.vmem %s1, 16
  %9 = vst [vmem:[%s8] sm:$0xff] %v4
  %s10 = scalar_lea.vmem %s1, 24
  %11 = vst [vmem:[%s10] sm:$0xff] %v4

// kernel: tile.18
$region0: #{tile.18}
  %s0 = inlined_call_operand.vmem [shape: f32[32,4], index: 0, kind: input, shape index: {}]
  %s1 = inlined_call_operand.vmem [shape: f32[1,128], index: 1, kind: output, shape index: {}]
  $region1: #{tile.18} parent=0
    #allocation0 [shape = 'u8[4096]{0}', space=vmem, size = 0x1000, scoped, tag = 'scoped mem for output reshape']
    %v2 = vld [vmem:[%s0] sm:$0x1]
    %vm3 = vcmask 31744
    %4 = vst.msk [vmem:[#allocation0] sm:$0x1] %vm3, %v2
    %s5 = scalar_lea.vmem %s0, 31
    %v6 = vld [vmem:[%s5] sm:$0x1]
    %7 = vrot.lane.b32.xlu0 %v6, 124
    %v8 = vpop.permute.xlu0 %7
    %vm9 = vcmask 1048544
    %10 = vst.msk [vmem:[#allocation0] sm:$0x1] %vm9, %v8
    %s11 = scalar_lea.vmem %s0, 30
    %v12 = vld [vmem:[%s11] sm:$0x1]
    %13 = vrot.lane.b32.xlu0 %v12, 120
    %v14 = vpop.permute.xlu0 %13
    %vm15 = vcmask 1015744
    %16 = vst.msk [vmem:[#allocation0] sm:$0x1] %vm15, %v14
    %s17 = scalar_lea.vmem %s0, 29
    %v18 = vld [vmem:[%s17] sm:$0x1]
    %19 = vrot.lane.b32.xlu0 %v18, 116
    %v20 = vpop.permute.xlu0 %19
    %vm21 = vcmask 982944
    %22 = vst.msk [vmem:[#allocation0] sm:$0x1] %vm21, %v20
    %s23 = scalar_lea.vmem %s0, 28
    %v24 = vld [vmem:[%s23] sm:$0x1]
    %25 = vrot.lane.b32.xlu0 %v24, 112
    %v26 = vpop.permute.xlu0 %25
    %vm27 = vcmask 950144
    %28 = vst.msk [vmem:[#allocation0] sm:$0x1] %vm27, %v26
    %s29 = scalar_lea.vmem %s0, 27
    %v30 = vld [vmem:[%s29] sm:$0x1]
    %31 = vrot.lane.b32.xlu0 %v30, 108
    %v32 = vpop.permute.xlu0 %31
    %vm33 = vcmask 917344
    %34 = vst.msk [vmem:[#allocation0] sm:$0x1] %vm33, %v32
    %s35 = scalar_lea.vmem %s0, 26
    %v36 = vld [vmem:[%s35] sm:$0x1]
    %37 = vrot.lane.b32.xlu0 %v36, 104
    %v38 = vpop.permute.xlu0 %37
    %vm39 = vcmask 884544
    %40 = vst.msk [vmem:[#allocation0] sm:$0x1] %vm39, %v38
    %s41 = scalar_lea.vmem %s0, 25
    %v42 = vld [vmem:[%s41] sm:$0x1]
    %43 = vrot.lane.b32.xlu0 %v42, 100
    %v44 = vpop.permute.xlu0 %43
    %vm45 = vcmask 851744
    %46 = vst.msk [vmem:[#allocation0] sm:$0x1] %vm45, %v44
    %s47 = scalar_lea.vmem %s0, 24
    %v48 = vld [vmem:[%s47] sm:$0x1]
    %49 = vrot.lane.b32.xlu0 %v48, 96
    %v50 = vpop.permute.xlu0 %49
    %vm51 = vcmask 818944
    %52 = vst.msk [vmem:[#allocation0] sm:$0x1] %vm51, %v50
    %s53 = scalar_lea.vmem %s0, 23
    %v54 = vld [vmem:[%s53] sm:$0x1]
    %55 = vrot.lane.b32.xlu0 %v54, 92
    %v56 = vpop.permute.xlu0 %55
    %vm57 = vcmask 786144
    %58 = vst.msk [vmem:[#allocation0] sm:$0x1] %vm57, %v56
    %s59 = scalar_lea.vmem %s0, 22
    %v60 = vld [vmem:[%s59] sm:$0x1]
    %61 = vrot.lane.b32.xlu0 %v60, 88
    %v62 = vpop.permute.xlu0 %61
    %vm63 = vcmask 753344
    %64 = vst.msk [vmem:[#allocation0] sm:$0x1] %vm63, %v62
    %s65 = scalar_lea.vmem %s0, 21
    %v66 = vld [vmem:[%s65] sm:$0x1]
    %67 = vrot.lane.b32.xlu0 %v66, 84
    %v68 = vpop.permute.xlu0 %67
    %vm69 = vcmask 720544
    %70 = vst.msk [vmem:[#allocation0] sm:$0x1] %vm69, %v68
    %s71 = scalar_lea.vmem %s0, 20
    %v72 = vld [vmem:[%s71] sm:$0x1]
    %73 = vrot.lane.b32.xlu0 %v72, 80
    %v74 = vpop.permute.xlu0 %73
    %vm75 = vcmask 687744
    %76 = vst.msk [vmem:[#allocation0] sm:$0x1] %vm75, %v74
    %s77 = scalar_lea.vmem %s0, 19
    %v78 = vld [vmem:[%s77] sm:$0x1]
    %79 = vrot.lane.b32.xlu0 %v78, 76
    %v80 = vpop.permute.xlu0 %79
    %vm81 = vcmask 654944
    %82 = vst.msk [vmem:[#allocation0] sm:$0x1] %vm81, %v80
    %s83 = scalar_lea.vmem %s0, 18
    %v84 = vld [vmem:[%s83] sm:$0x1]
    %85 = vrot.lane.b32.xlu0 %v84, 72
    %v86 = vpop.permute.xlu0 %85
    %vm87 = vcmask 622144
    %88 = vst.msk [vmem:[#allocation0] sm:$0x1] %vm87, %v86
    %s89 = scalar_lea.vmem %s0, 17
    %v90 = vld [vmem:[%s89] sm:$0x1]
    %91 = vrot.lane.b32.xlu0 %v90, 68
    %v92 = vpop.permute.xlu0 %91
    %vm93 = vcmask 589344
    %94 = vst.msk [vmem:[#allocation0] sm:$0x1] %vm93, %v92
    %s95 = scalar_lea.vmem %s0, 16
    %v96 = vld [vmem:[%s95] sm:$0x1]
    %97 = vrot.lane.b32.xlu0 %v96, 64
    %v98 = vpop.permute.xlu0 %97
    %vm99 = vcmask 556544
    %100 = vst.msk [vmem:[#allocation0] sm:$0x1] %vm99, %v98
    %s101 = scalar_lea.vmem %s0, 15
    %v102 = vld [vmem:[%s101] sm:$0x1]
    %103 = vrot.lane.b32.xlu0 %v102, 60
    %v104 = vpop.permute.xlu0 %103
    %vm105 = vcmask 523744
    %106 = vst.msk [vmem:[#allocation0] sm:$0x1] %vm105, %v104
    %s107 = scalar_lea.vmem %s0, 14
    %v108 = vld [vmem:[%s107] sm:$0x1]
    %109 = vrot.lane.b32.xlu0 %v108, 56
    %v110 = vpop.permute.xlu0 %109
    %vm111 = vcmask 490944
    %112 = vst.msk [vmem:[#allocation0] sm:$0x1] %vm111, %v110
    %s113 = scalar_lea.vmem %s0, 13
    %v114 = vld [vmem:[%s113] sm:$0x1]
    %115 = vrot.lane.b32.xlu0 %v114, 52
    %v116 = vpop.permute.xlu0 %115
    %vm117 = vcmask 458144
    %118 = vst.msk [vmem:[#allocation0] sm:$0x1] %vm117, %v116
    %s119 = scalar_lea.vmem %s0, 12
    %v120 = vld [vmem:[%s119] sm:$0x1]
    %121 = vrot.lane.b32.xlu0 %v120, 48
    %v122 = vpop.permute.xlu0 %121
    %vm123 = vcmask 425344
    %124 = vst.msk [vmem:[#allocation0] sm:$0x1] %vm123, %v122
    %s125 = scalar_lea.vmem %s0, 11
    %v126 = vld [vmem:[%s125] sm:$0x1]
    %127 = vrot.lane.b32.xlu0 %v126, 44
    %v128 = vpop.permute.xlu0 %127
    %vm129 = vcmask 392544
    %130 = vst.msk [vmem:[#allocation0] sm:$0x1] %vm129, %v128
    %s131 = scalar_lea.vmem %s0, 10
    %v132 = vld [vmem:[%s131] sm:$0x1]
    %133 = vrot.lane.b32.xlu0 %v132, 40
    %v134 = vpop.permute.xlu0 %133
    %vm135 = vcmask 359744
    %136 = vst.msk [vmem:[#allocation0] sm:$0x1] %vm135, %v134
    %s137 = scalar_lea.vmem %s0, 9
    %v138 = vld [vmem:[%s137] sm:$0x1]
    %139 = vrot.lane.b32.xlu0 %v138, 36
    %v140 = vpop.permute.xlu0 %139
    %vm141 = vcmask 326944
    %142 = vst.msk [vmem:[#allocation0] sm:$0x1] %vm141, %v140
    %s143 = scalar_lea.vmem %s0, 8
    %v144 = vld [vmem:[%s143] sm:$0x1]
    %145 = vrot.lane.b32.xlu0 %v144, 32
    %v146 = vpop.permute.xlu0 %145
    %vm147 = vcmask 294144
    %148 = vst.msk [vmem:[#allocation0] sm:$0x1] %vm147, %v146
    %s149 = scalar_lea.vmem %s0, 7
    %v150 = vld [vmem:[%s149] sm:$0x1]
    %151 = vrot.lane.b32.xlu0 %v150, 28
    %v152 = vpop.permute.xlu0 %151
    %vm153 = vcmask 261344
    %154 = vst.msk [vmem:[#allocation0] sm:$0x1] %vm153, %v152
    %s155 = scalar_lea.vmem %s0, 6
    %v156 = vld [vmem:[%s155] sm:$0x1]
    %157 = vrot.lane.b32.xlu0 %v156, 24
    %v158 = vpop.permute.xlu0 %157
    %vm159 = vcmask 228544
    %160 = vst.msk [vmem:[#allocation0] sm:$0x1] %vm159, %v158
    %s161 = scalar_lea.vmem %s0, 5
    %v162 = vld [vmem:[%s161] sm:$0x1]
    %163 = vrot.lane.b32.xlu0 %v162, 20
    %v164 = vpop.permute.xlu0 %163
    %vm165 = vcmask 195744
    %166 = vst.msk [vmem:[#allocation0] sm:$0x1] %vm165, %v164
    %s167 = scalar_lea.vmem %s0, 4
    %v168 = vld [vmem:[%s167] sm:$0x1]
    %169 = vrot.lane.b32.xlu0 %v168, 16
    %v170 = vpop.permute.xlu0 %169
    %vm171 = vcmask 162944
    %172 = vst.msk [vmem:[#allocation0] sm:$0x1] %vm171, %v170
    %s173 = scalar_lea.vmem %s0, 3
    %v174 = vld [vmem:[%s173] sm:$0x1]
    %175 = vrot.lane.b32.xlu0 %v174, 12
    %v176 = vpop.permute.xlu0 %175
    %vm177 = vcmask 130144
    %178 = vst.msk [vmem:[#allocation0] sm:$0x1] %vm177, %v176
    %s179 = scalar_lea.vmem %s0, 2
    %v180 = vld [vmem:[%s179] sm:$0x1]
    %181 = vrot.lane.b32.xlu0 %v180, 8
    %v182 = vpop.permute.xlu0 %181
    %vm183 = vcmask 97344
    %184 = vst.msk [vmem:[#allocation0] sm:$0x1] %vm183, %v182
    %s185 = scalar_lea.vmem %s0, 1
    %v186 = vld [vmem:[%s185] sm:$0x1]
    %187 = vrot.lane.b32.xlu0 %v186, 4
    %v188 = vpop.permute.xlu0 %187
    %vm189 = vcmask 64544
    %190 = vst.msk [vmem:[#allocation0] sm:$0x1] %vm189, %v188
    %s192 = sshllo.u32 0, 1
    %v194 = vld [vmem:[#allocation0] sm:%s192]
    %s195 = sshllo.u32 0, 1
    %196 = vst [vmem:[%s1] sm:%s195] %v194

// kernel: resnet_forward.1
$region0: #{resnet_forward.1}
  #allocation0 [shape = 'u32[]', space=smem, size = 0x4, offset = 0x4, fixed_abs, tag = 'smem constant byte address 0x4 - core index']
  #allocation1 [shape = 'u32[144,128]{1,0:T(1,128)}', space=vmem, size = 0x12000, scoped, tag = 'internal scratch']
  %s0 = inlined_call_operand.vmem [shape: f32[16,128], index: 0, kind: input, shape index: {}]
  %s1 = inlined_call_operand.vmem [shape: f32[2,384,128], index: 1, kind: input, shape index: {}]
  %s2 = inlined_call_operand.vmem [shape: f32[2,1,128], index: 2, kind: input, shape index: {}]
  %s3 = inlined_call_operand.vmem [shape: f32[16,128], index: 3, kind: output, shape index: {}]
  %s4 = sld [smem:[#allocation0]]
  $region22: #{resnet_forward.1} parent=0
    _
  %s6 = ssub.s32 1, %s4
  %s7 = scalar_select 0, %s6, %s4
  // Predicated region
  $region2: #{resnet_forward.1} parent=0 // pred_check
    _
  $region3: #{resnet_forward.1} parent=0 // pred_check_branch
    %9 = sbr.rel (0) target = $region5
  $region4: #{resnet_forward.1} parent=0 // pred_region
    _
  $region5: #{resnet_forward.1} parent=0 // pred_fallthru
    _
  // Predicated region
  $region6: #{resnet_forward.1} parent=0 // pred_check
    _
  $region7: #{resnet_forward.1} parent=0 // pred_check_branch
    %11 = sbr.rel (0) target = $region9
  $region8: #{resnet_forward.1} parent=0 // pred_region
    _
  $region9: #{resnet_forward.1} parent=0 // pred_fallthru
    _
  // Predicated region
  $region10: #{resnet_forward.1} parent=0 // pred_check
    _
  $region11: #{resnet_forward.1} parent=0 // pred_check_branch
    %13 = sbr.rel (0) target = $region13
  $region12: #{resnet_forward.1} parent=0 // pred_region
    _
  $region13: #{resnet_forward.1} parent=0 // pred_fallthru
    _
  %v14 = vld [vmem:[%s0] sm:$0xff]
  %v15 = vld [vmem:[%s0 + $0x8] sm:$0xff]
  %v16 = vlaneseq
  %v17 = vshrl.u32 %v16, 7
  %v18 = vadd.s32 %v17, 8
  %vm19 = vcmp.eq.s32.totalorder %v17, 0
  %vm20 = vcmp.eq.s32.totalorder %v18, 0
  %vm21 = vcmp.eq.s32.totalorder %v17, 15
  %vm22 = vcmp.eq.s32.totalorder %v18, 15
  %v23 = vrot.slane %v14, 7
  %v24 = vrot.slane %v15, 7
  %vm25 = vcmp.lt.s32.totalorder %v17, 1
  %v26 = vsel %vm25, %v23, %v24
  %v27 = vsel %vm25, %v24, %v23
  %v28 = vsel %vm19, 0.0, %v27
  %v29 = vsel %vm20, 0.0, %v26
  %v30 = vrot.slane %v14, 1
  %v31 = vrot.slane %v15, 1
  %vm32 = vcmp.lt.s32.totalorder %v17, 7
  %v33 = vsel %vm32, %v30, %v31
  %v34 = vsel %vm32, %v31, %v30
  %v35 = vsel %vm21, 0.0, %v33
  %v36 = vsel %vm22, 0.0, %v34
  %v37 = vld [vmem:[%s1] sm:$0xff]
  %v38 = vld [vmem:[%s1 + $0x8] sm:$0xff]
  %v39 = vld [vmem:[%s1 + $0x10] sm:$0xff]
  %v40 = vld [vmem:[%s1 + $0x18] sm:$0xff]
  %v41 = vld [vmem:[%s1 + $0x20] sm:$0xff]
  %v42 = vld [vmem:[%s1 + $0x28] sm:$0xff]
  %v43 = vld [vmem:[%s1 + $0x30] sm:$0xff]
  %v44 = vld [vmem:[%s1 + $0x38] sm:$0xff]
  %v45 = vld [vmem:[%s1 + $0x40] sm:$0xff]
  %v46 = vld [vmem:[%s1 + $0x48] sm:$0xff]
  %v47 = vld [vmem:[%s1 + $0x50] sm:$0xff]
  %v48 = vld [vmem:[%s1 + $0x58] sm:$0xff]
  %v49 = vld [vmem:[%s1 + $0x60] sm:$0xff]
  %v50 = vld [vmem:[%s1 + $0x68] sm:$0xff]
  %v51 = vld [vmem:[%s1 + $0x70] sm:$0xff]
  %v52 = vld [vmem:[%s1 + $0x78] sm:$0xff]
  %v53 = vld [vmem:[%s1 + $0x80] sm:$0xff]
  %v54 = vld [vmem:[%s1 + $0x88] sm:$0xff]
  %v55 = vld [vmem:[%s1 + $0x90] sm:$0xff]
  %v56 = vld [vmem:[%s1 + $0x98] sm:$0xff]
  %v57 = vld [vmem:[%s1 + $0xa0] sm:$0xff]
  %v58 = vld [vmem:[%s1 + $0xa8] sm:$0xff]
  %v59 = vld [vmem:[%s1 + $0xb0] sm:$0xff]
  %v60 = vld [vmem:[%s1 + $0xb8] sm:$0xff]
  %v61 = vld [vmem:[%s1 + $0xc0] sm:$0xff]
  %v62 = vld [vmem:[%s1 + $0xc8] sm:$0xff]
  %v63 = vld [vmem:[%s1 + $0xd0] sm:$0xff]
  %v64 = vld [vmem:[%s1 + $0xd8] sm:$0xff]
  %v65 = vld [vmem:[%s1 + $0xe0] sm:$0xff]
  %v66 = vld [vmem:[%s1 + $0xe8] sm:$0xff]
  %v67 = vld [vmem:[%s1 + $0xf0] sm:$0xff]
  %v68 = vld [vmem:[%s1 + $0xf8] sm:$0xff]
  %v69 = vld [vmem:[%s1 + $0x100] sm:$0xff]
  %v70 = vld [vmem:[%s1 + $0x108] sm:$0xff]
  %v71 = vld [vmem:[%s1 + $0x110] sm:$0xff]
  %v72 = vld [vmem:[%s1 + $0x118] sm:$0xff]
  %v73 = vld [vmem:[%s1 + $0x120] sm:$0xff]
  %v74 = vld [vmem:[%s1 + $0x128] sm:$0xff]
  %v75 = vld [vmem:[%s1 + $0x130] sm:$0xff]
  %v76 = vld [vmem:[%s1 + $0x138] sm:$0xff]
  %v77 = vld [vmem:[%s1 + $0x140] sm:$0xff]
  %v78 = vld [vmem:[%s1 + $0x148] sm:$0xff]
  %v79 = vld [vmem:[%s1 + $0x150] sm:$0xff]
  %v80 = vld [vmem:[%s1 + $0x158] sm:$0xff]
  %v81 = vld [vmem:[%s1 + $0x160] sm:$0xff]
  %v82 = vld [vmem:[%s1 + $0x168] sm:$0xff]
  %v83 = vld [vmem:[%s1 + $0x170] sm:$0xff]
  %v84 = vld [vmem:[%s1 + $0x178] sm:$0xff]
  %v85 = vld [vmem:[%s2] sm:$0x1]
  %v87 = vlaneseq
  %v88 = vshrl.u32 %v87, 7
  %v89 = vsub.s32 0, %v88
  %v90 = vrot.slane %v85, %v89
  %92 = vmatprep.subr.mxu0 0.0
  %93 = vmatpush1.msra.mxu0 %v37
  %94 = vmatprep.subr.mxu0 0.0
  %95 = vmatpush1.msra.mxu0 %v38
  %96 = vmatprep.subr.mxu0 0.0
  %97 = vmatpush1.msra.mxu0 %v39
  %98 = vmatprep.subr.mxu0 0.0
  %99 = vmatpush1.msra.mxu0 %v40
  %100 = vmatprep.subr.mxu0 0.0
  %101 = vmatpush1.msra.mxu0 %v41
  %102 = vmatprep.subr.mxu0 0.0
  %103 = vmatpush1.msra.mxu0 %v42
  %104 = vmatprep.subr.mxu0 0.0
  %105 = vmatpush1.msra.mxu0 %v43
  %106 = vmatprep.subr.mxu0 0.0
  %107 = vmatpush1.msra.mxu0 %v44
  %108 = vmatprep.subr.mxu0 0.0
  %109 = vmatpush1.msra.mxu0 %v45
  %110 = vmatprep.subr.mxu0 0.0
  %111 = vmatpush1.msra.mxu0 %v46
  %112 = vmatprep.subr.mxu0 0.0
  %113 = vmatpush1.msra.mxu0 %v47
  %114 = vmatprep.subr.mxu0 0.0
  %115 = vmatpush1.msra.mxu0 %v48
  %116 = vmatprep.subr.mxu0 0.0
  %117 = vmatpush1.msra.mxu0 %v49
  %118 = vmatprep.subr.mxu0 0.0
  %119 = vmatpush1.msra.mxu0 %v50
  %120 = vmatprep.subr.mxu0 0.0
  %121 = vmatpush1.msra.mxu0 %v51
  %122 = vmatprep.subr.mxu0 0.0
  %123 = vmatpush1.msra.mxu0 %v52
  %124 = vmatprep.subr.mxu0 0.0
  %125 = vmatpush1.msra.mxu0 %v53
  %126 = vmatprep.subr.mxu0 0.0
  %127 = vmatpush1.msra.mxu0 %v54
  %128 = vmatprep.subr.mxu0 0.0
  %129 = vmatpush1.msra.mxu0 %v55
  %130 = vmatprep.subr.mxu0 0.0
  %131 = vmatpush1.msra.mxu0 %v56
  %132 = vmatprep.subr.mxu0 0.0
  %133 = vmatpush1.msra.mxu0 %v57
  %134 = vmatprep.subr.mxu0 0.0
  %135 = vmatpush1.msra.mxu0 %v58
  %136 = vmatprep.subr.mxu0 0.0
  %137 = vmatpush1.msra.mxu0 %v59
  %138 = vmatprep.subr.mxu0 0.0
  %139 = vmatpush1.msra.mxu0 %v60
  %140 = vmatprep.subr.mxu0 0.0
  %141 = vmatpush1.msra.mxu0 %v61
  %142 = vmatprep.subr.mxu0 0.0
  %143 = vmatpush1.msra.mxu0 %v62
  %144 = vmatprep.subr.mxu0 0.0
  %145 = vmatpush1.msra.mxu0 %v63
  %146 = vmatprep.subr.mxu0 0.0
  %147 = vmatpush1.msra.mxu0 %v64
  %148 = vmatprep.subr.mxu0 0.0
  %149 = vmatpush1.msra.mxu0 %v65
  %150 = vmatprep.subr.mxu0 0.0
  %151 = vmatpush1.msra.mxu0 %v66
  %152 = vmatprep.subr.mxu0 0.0
  %153 = vmatpush1.msra.mxu0 %v67
  %154 = vmatprep.subr.mxu0 0.0
  %155 = vmatpush1.msra.mxu0 %v68
  %156 = vmatprep.mubr.f32.mxu0 %v14
  %157 = vmatmul.mubr.f32.gmra.mrb[0].mxu0 %v28
  %v158 = vpop.f32.mrb[0].mxu0
  %v159 = vadd.f32 %v90, %v158
  %v160 = vpop.f32.mrb[0].mxu0
  %161 = vmatprep.mubr.f32.mxu0 %v15
  %162 = vmatmul.mubr.f32.gmra.mrb[0].mxu0 %v29
  %v163 = vpop.f32.mrb[0].mxu0
  %v164 = vadd.f32 %v90, %v163
  %v165 = vpop.f32.mrb[0].mxu0
  %166 = vdwg.mxu0
  %167 = vmatprep.subr.mxu0 0.0
  %168 = vmatpush1.msra.mxu0 %v69
  %169 = vmatprep.subr.mxu0 0.0
  %170 = vmatpush1.msra.mxu0 %v70
  %171 = vmatprep.subr.mxu0 0.0
  %172 = vmatpush1.msra.mxu0 %v71
  %173 = vmatprep.subr.mxu0 0.0
  %174 = vmatpush1.msra.mxu0 %v72
  %175 = vmatprep.subr.mxu0 0.0
  %176 = vmatpush1.msra.mxu0 %v73
  %177 = vmatprep.subr.mxu0 0.0
  %178 = vmatpush1.msra.mxu0 %v74
  %179 = vmatprep.subr.mxu0 0.0
  %180 = vmatpush1.msra.mxu0 %v75
  %181 = vmatprep.subr.mxu0 0.0
  %182 = vmatpush1.msra.mxu0 %v76
  %183 = vmatprep.subr.mxu0 0.0
  %184 = vmatpush1.msra.mxu0 %v77
  %185 = vmatprep.subr.mxu0 0.0
  %186 = vmatpush1.msra.mxu0 %v78
  %187 = vmatprep.subr.mxu0 0.0
  %188 = vmatpush1.msra.mxu0 %v79
  %189 = vmatprep.subr.mxu0 0.0
  %190 = vmatpush1.msra.mxu0 %v80
  %191 = vmatprep.subr.mxu0 0.0
  %192 = vmatpush1.msra.mxu0 %v81
  %193 = vmatprep.subr.mxu0 0.0
  %194 = vmatpush1.msra.mxu0 %v82
  %195 = vmatprep.subr.mxu0 0.0
  %196 = vmatpush1.msra.mxu0 %v83
  %197 = vmatprep.subr.mxu0 0.0
  %198 = vmatpush1.msra.mxu0 %v84
  %199 = vmatprep.subr.mxu0 0.0
  %200 = vmatpush1.msra.mxu0 0.0
  %201 = vmatprep.subr.mxu0 0.0
  %202 = vmatpush1.msra.mxu0 0.0
  %203 = vmatprep.subr.mxu0 0.0
  %204 = vmatpush1.msra.mxu0 0.0
  %205 = vmatprep.subr.mxu0 0.0
  %206 = vmatpush1.msra.mxu0 0.0
  %207 = vmatprep.subr.mxu0 0.0
  %208 = vmatpush1.msra.mxu0 0.0
  %209 = vmatprep.subr.mxu0 0.0
  %210 = vmatpush1.msra.mxu0 0.0
  %211 = vmatprep.subr.mxu0 0.0
  %212 = vmatpush1.msra.mxu0 0.0
  %213 = vmatprep.subr.mxu0 0.0
  %214 = vmatpush1.msra.mxu0 0.0
  %215 = vmatprep.subr.mxu0 0.0
  %216 = vmatpush1.msra.mxu0 0.0
  %217 = vmatprep.subr.mxu0 0.0
  %218 = vmatpush1.msra.mxu0 0.0
  %219 = vmatprep.subr.mxu0 0.0
  %220 = vmatpush1.msra.mxu0 0.0
  %221 = vmatprep.subr.mxu0 0.0
  %222 = vmatpush1.msra.mxu0 0.0
  %223 = vmatprep.subr.mxu0 0.0
  %224 = vmatpush1.msra.mxu0 0.0
  %225 = vmatprep.subr.mxu0 0.0
  %226 = vmatpush1.msra.mxu0 0.0
  %227 = vmatprep.subr.mxu0 0.0
  %228 = vmatpush1.msra.mxu0 0.0
  %229 = vmatprep.subr.mxu0 0.0
  %230 = vmatpush1.msra.mxu0 0.0
  %231 = vmatprep.mubr.f32.mxu0 0.0
  %232 = vmatmul.mubr.f32.gmra.mrb[0].mxu0 %v35
  %v233 = vpop.f32.mrb[0].mxu0
  %v234 = vadd.f32 %v159, %v233
  %v235 = vpop.f32.mrb[0].mxu0
  %236 = vmatprep.mubr.f32.mxu0 0.0
  %237 = vmatmul.mubr.f32.gmra.mrb[0].mxu0 %v36
  %v238 = vpop.f32.mrb[0].mxu0
  %v239 = vadd.f32 %v164, %v238
  %v240 = vpop.f32.mrb[0].mxu0
  %241 = vdwg.mxu0
  %v242 = vmul.f32 %v234, 0.5
  %v243 = vmul.f32 %v239, 0.5
  %v244 = vmul.f32 %v234, 0.70710677
  %v245 = vmul.f32 %v239, 0.70710677
  %v246 = verf.f32.pop %v244
  %v247 = verf.f32.pop %v245
  %v248 = vadd.f32 %v246, 1.0
  %v249 = vadd.f32 %v247, 1.0
  %v250 = vmul.f32 %v242, %v248
  %v251 = vmul.f32 %v243, %v249
  %v252 = vrot.slane %v250, 7
  %v253 = vrot.slane %v251, 7
  %v254 = vsel %vm25, %v252, %v253
  %v255 = vsel %vm25, %v253, %v252
  %v256 = vsel %vm19, 0.0, %v255
  %v257 = vsel %vm20, 0.0, %v254
  %v258 = vrot.slane %v250, 1
  %v259 = vrot.slane %v251, 1
  %v260 = vsel %vm32, %v258, %v259
  %v261 = vsel %vm32, %v259, %v258
  %v262 = vsel %vm21, 0.0, %v260
  %v263 = vsel %vm22, 0.0, %v261
  %s264 = scalar_lea.vmem %s1, 384
  %v265 = vld [vmem:[%s264] sm:$0xff]
  %v266 = vld [vmem:[%s264 + $0x8] sm:$0xff]
  %v267 = vld [vmem:[%s264 + $0x10] sm:$0xff]
  %v268 = vld [vmem:[%s264 + $0x18] sm:$0xff]
  %v269 = vld [vmem:[%s264 + $0x20] sm:$0xff]
  %v270 = vld [vmem:[%s264 + $0x28] sm:$0xff]
  %v271 = vld [vmem:[%s264 + $0x30] sm:$0xff]
  %v272 = vld [vmem:[%s264 + $0x38] sm:$0xff]
  %v273 = vld [vmem:[%s264 + $0x40] sm:$0xff]
  %v274 = vld [vmem:[%s264 + $0x48] sm:$0xff]
  %v275 = vld [vmem:[%s264 + $0x50] sm:$0xff]
  %v276 = vld [vmem:[%s264 + $0x58] sm:$0xff]
  %v277 = vld [vmem:[%s264 + $0x60] sm:$0xff]
  %v278 = vld [vmem:[%s264 + $0x68] sm:$0xff]
  %v279 = vld [vmem:[%s264 + $0x70] sm:$0xff]
  %v280 = vld [vmem:[%s264 + $0x78] sm:$0xff]
  %v281 = vld [vmem:[%s264 + $0x80] sm:$0xff]
  %v282 = vld [vmem:[%s264 + $0x88] sm:$0xff]
  %v283 = vld [vmem:[%s264 + $0x90] sm:$0xff]
  %v284 = vld [vmem:[%s264 + $0x98] sm:$0xff]
  %v285 = vld [vmem:[%s264 + $0xa0] sm:$0xff]
  %v286 = vld [vmem:[%s264 + $0xa8] sm:$0xff]
  %v287 = vld [vmem:[%s264 + $0xb0] sm:$0xff]
  %v288 = vld [vmem:[%s264 + $0xb8] sm:$0xff]
  %v289 = vld [vmem:[%s264 + $0xc0] sm:$0xff]
  %v290 = vld [vmem:[%s264 + $0xc8] sm:$0xff]
  %v291 = vld [vmem:[%s264 + $0xd0] sm:$0xff]
  %v292 = vld [vmem:[%s264 + $0xd8] sm:$0xff]
  %v293 = vld [vmem:[%s264 + $0xe0] sm:$0xff]
  %v294 = vld [vmem:[%s264 + $0xe8] sm:$0xff]
  %v295 = vld [vmem:[%s264 + $0xf0] sm:$0xff]
  %v296 = vld [vmem:[%s264 + $0xf8] sm:$0xff]
  %v297 = vld [vmem:[%s264 + $0x100] sm:$0xff]
  %v298 = vld [vmem:[%s264 + $0x108] sm:$0xff]
  %v299 = vld [vmem:[%s264 + $0x110] sm:$0xff]
  %v300 = vld [vmem:[%s264 + $0x118] sm:$0xff]
  %v301 = vld [vmem:[%s264 + $0x120] sm:$0xff]
  %v302 = vld [vmem:[%s264 + $0x128] sm:$0xff]
  %v303 = vld [vmem:[%s264 + $0x130] sm:$0xff]
  %v304 = vld [vmem:[%s264 + $0x138] sm:$0xff]
  %v305 = vld [vmem:[%s264 + $0x140] sm:$0xff]
  %v306 = vld [vmem:[%s264 + $0x148] sm:$0xff]
  %v307 = vld [vmem:[%s264 + $0x150] sm:$0xff]
  %v308 = vld [vmem:[%s264 + $0x158] sm:$0xff]
  %v309 = vld [vmem:[%s264 + $0x160] sm:$0xff]
  %v310 = vld [vmem:[%s264 + $0x168] sm:$0xff]
  %v311 = vld [vmem:[%s264 + $0x170] sm:$0xff]
  %v312 = vld [vmem:[%s264 + $0x178] sm:$0xff]
  %s313 = scalar_lea.vmem %s2, 1
  %v314 = vld [vmem:[%s313] sm:$0x1]
  %v316 = vlaneseq
  %v317 = vshrl.u32 %v316, 7
  %v318 = vsub.s32 0, %v317
  %v319 = vrot.slane %v314, %v318
  %321 = vmatprep.subr.mxu0 0.0
  %322 = vmatpush1.msra.mxu0 %v265
  %323 = vmatprep.subr.mxu0 0.0
  %324 = vmatpush1.msra.mxu0 %v266
  %325 = vmatprep.subr.mxu0 0.0
  %326 = vmatpush1.msra.mxu0 %v267
  %327 = vmatprep.subr.mxu0 0.0
  %328 = vmatpush1.msra.mxu0 %v268
  %329 = vmatprep.subr.mxu0 0.0
  %330 = vmatpush1.msra.mxu0 %v269
  %331 = vmatprep.subr.mxu0 0.0
  %332 = vmatpush1.msra.mxu0 %v270
  %333 = vmatprep.subr.mxu0 0.0
  %334 = vmatpush1.msra.mxu0 %v271
  %335 = vmatprep.subr.mxu0 0.0
  %336 = vmatpush1.msra.mxu0 %v272
  %337 = vmatprep.subr.mxu0 0.0
  %338 = vmatpush1.msra.mxu0 %v273
  %339 = vmatprep.subr.mxu0 0.0
  %340 = vmatpush1.msra.mxu0 %v274
  %341 = vmatprep.subr.mxu0 0.0
  %342 = vmatpush1.msra.mxu0 %v275
  %343 = vmatprep.subr.mxu0 0.0
  %344 = vmatpush1.msra.mxu0 %v276
  %345 = vmatprep.subr.mxu0 0.0
  %346 = vmatpush1.msra.mxu0 %v277
  %347 = vmatprep.subr.mxu0 0.0
  %348 = vmatpush1.msra.mxu0 %v278
  %349 = vmatprep.subr.mxu0 0.0
  %350 = vmatpush1.msra.mxu0 %v279
  %351 = vmatprep.subr.mxu0 0.0
  %352 = vmatpush1.msra.mxu0 %v280
  %353 = vmatprep.subr.mxu0 0.0
  %354 = vmatpush1.msra.mxu0 %v281
  %355 = vmatprep.subr.mxu0 0.0
  %356 = vmatpush1.msra.mxu0 %v282
  %357 = vmatprep.subr.mxu0 0.0
  %358 = vmatpush1.msra.mxu0 %v283
  %359 = vmatprep.subr.mxu0 0.0
  %360 = vmatpush1.msra.mxu0 %v284
  %361 = vmatprep.subr.mxu0 0.0
  %362 = vmatpush1.msra.mxu0 %v285
  %363 = vmatprep.subr.mxu0 0.0
  %364 = vmatpush1.msra.mxu0 %v286
  %365 = vmatprep.subr.mxu0 0.0
  %366 = vmatpush1.msra.mxu0 %v287
  %367 = vmatprep.subr.mxu0 0.0
  %368 = vmatpush1.msra.mxu0 %v288
  %369 = vmatprep.subr.mxu0 0.0
  %370 = vmatpush1.msra.mxu0 %v289
  %371 = vmatprep.subr.mxu0 0.0
  %372 = vmatpush1.msra.mxu0 %v290
  %373 = vmatprep.subr.mxu0 0.0
  %374 = vmatpush1.msra.mxu0 %v291
  %375 = vmatprep.subr.mxu0 0.0
  %376 = vmatpush1.msra.mxu0 %v292
  %377 = vmatprep.subr.mxu0 0.0
  %378 = vmatpush1.msra.mxu0 %v293
  %379 = vmatprep.subr.mxu0 0.0
  %380 = vmatpush1.msra.mxu0 %v294
  %381 = vmatprep.subr.mxu0 0.0
  %382 = vmatpush1.msra.mxu0 %v295
  %383 = vmatprep.subr.mxu0 0.0
  %384 = vmatpush1.msra.mxu0 %v296
  %385 = vmatprep.mubr.f32.mxu0 %v250
  %386 = vmatmul.mubr.f32.gmra.mrb[0].mxu0 %v256
  %v387 = vpop.f32.mrb[0].mxu0
  %v388 = vadd.f32 %v319, %v387
  %v389 = vpop.f32.mrb[0].mxu0
  %390 = vmatprep.mubr.f32.mxu0 %v251
  %391 = vmatmul.mubr.f32.gmra.mrb[0].mxu0 %v257
  %v392 = vpop.f32.mrb[0].mxu0
  %v393 = vadd.f32 %v319, %v392
  %v394 = vpop.f32.mrb[0].mxu0
  %395 = vdwg.mxu0
  %396 = vmatprep.subr.mxu0 0.0
  %397 = vmatpush1.msra.mxu0 %v297
  %398 = vmatprep.subr.mxu0 0.0
  %399 = vmatpush1.msra.mxu0 %v298
  %400 = vmatprep.subr.mxu0 0.0
  %401 = vmatpush1.msra.mxu0 %v299
  %402 = vmatprep.subr.mxu0 0.0
  %403 = vmatpush1.msra.mxu0 %v300
  %404 = vmatprep.subr.mxu0 0.0
  %405 = vmatpush1.msra.mxu0 %v301
  %406 = vmatprep.subr.mxu0 0.0
  %407 = vmatpush1.msra.mxu0 %v302
  %408 = vmatprep.subr.mxu0 0.0
  %409 = vmatpush1.msra.mxu0 %v303
  %410 = vmatprep.subr.mxu0 0.0
  %411 = vmatpush1.msra.mxu0 %v304
  %412 = vmatprep.subr.mxu0 0.0
  %413 = vmatpush1.msra.mxu0 %v305
  %414 = vmatprep.subr.mxu0 0.0
  %415 = vmatpush1.msra.mxu0 %v306
  %416 = vmatprep.subr.mxu0 0.0
  %417 = vmatpush1.msra.mxu0 %v307
  %418 = vmatprep.subr.mxu0 0.0
  %419 = vmatpush1.msra.mxu0 %v308
  %420 = vmatprep.subr.mxu0 0.0
  %421 = vmatpush1.msra.mxu0 %v309
  %422 = vmatprep.subr.mxu0 0.0
  %423 = vmatpush1.msra.mxu0 %v310
  %424 = vmatprep.subr.mxu0 0.0
  %425 = vmatpush1.msra.mxu0 %v311
  %426 = vmatprep.subr.mxu0 0.0
  %427 = vmatpush1.msra.mxu0 %v312
  %428 = vmatprep.subr.mxu0 0.0
  %429 = vmatpush1.msra.mxu0 0.0
  %430 = vmatprep.subr.mxu0 0.0
  %431 = vmatpush1.msra.mxu0 0.0
  %432 = vmatprep.subr.mxu0 0.0
  %433 = vmatpush1.msra.mxu0 0.0
  %434 = vmatprep.subr.mxu0 0.0
  %435 = vmatpush1.msra.mxu0 0.0
  %436 = vmatprep.subr.mxu0 0.0
  %437 = vmatpush1.msra.mxu0 0.0
  %438 = vmatprep.subr.mxu0 0.0
  %439 = vmatpush1.msra.mxu0 0.0
  %440 = vmatprep.subr.mxu0 0.0
  %441 = vmatpush1.msra.mxu0 0.0
  %442 = vmatprep.subr.mxu0 0.0
  %443 = vmatpush1.msra.mxu0 0.0
  %444 = vmatprep.subr.mxu0 0.0
  %445 = vmatpush1.msra.mxu0 0.0
  %446 = vmatprep.subr.mxu0 0.0
  %447 = vmatpush1.msra.mxu0 0.0
  %448 = vmatprep.subr.mxu0 0.0
  %449 = vmatpush1.msra.mxu0 0.0
  %450 = vmatprep.subr.mxu0 0.0
  %451 = vmatpush1.msra.mxu0 0.0
  %452 = vmatprep.subr.mxu0 0.0
  %453 = vmatpush1.msra.mxu0 0.0
  %454 = vmatprep.subr.mxu0 0.0
  %455 = vmatpush1.msra.mxu0 0.0
  %456 = vmatprep.subr.mxu0 0.0
  %457 = vmatpush1.msra.mxu0 0.0
  %458 = vmatprep.subr.mxu0 0.0
  %459 = vmatpush1.msra.mxu0 0.0
  %460 = vmatprep.mubr.f32.mxu0 0.0
  %461 = vmatmul.mubr.f32.gmra.mrb[0].mxu0 %v262
  %v462 = vpop.f32.mrb[0].mxu0
  %v463 = vadd.f32 %v388, %v462
  %v464 = vpop.f32.mrb[0].mxu0
  %465 = vmatprep.mubr.f32.mxu0 0.0
  %466 = vmatmul.mubr.f32.gmra.mrb[0].mxu0 %v263
  %v467 = vpop.f32.mrb[0].mxu0
  %v468 = vadd.f32 %v393, %v467
  %v469 = vpop.f32.mrb[0].mxu0
  %470 = vdwg.mxu0
  %v471 = vmul.f32 %v463, 0.5
  %v472 = vmul.f32 %v468, 0.5
  %v473 = vmul.f32 %v463, 0.70710677
  %v474 = vmul.f32 %v468, 0.70710677
  %v475 = verf.f32.pop %v473
  %v476 = verf.f32.pop %v474
  %v477 = vadd.f32 %v475, 1.0
  %v478 = vadd.f32 %v476, 1.0
  %v479 = vmul.f32 %v471, %v477
  %v480 = vmul.f32 %v472, %v478
  %v481 = vadd.f32 %v479, %v14
  %v482 = vadd.f32 %v480, %v15
  %483 = vst [vmem:[%s3] sm:$0xff] %v481
  %484 = vst [vmem:[%s3 + $0x8] sm:$0xff] %v482
  // Predicated region
  $region14: #{resnet_forward.1} parent=0 // pred_check
    _
  $region15: #{resnet_forward.1} parent=0 // pred_check_branch
    %486 = sbr.rel (0) target = $region17
  $region16: #{resnet_forward.1} parent=0 // pred_region
    _
  $region17: #{resnet_forward.1} parent=0 // pred_fallthru
    _
  // Predicated region
  $region18: #{resnet_forward.1} parent=0 // pred_check
    _
  $region19: #{resnet_forward.1} parent=0 // pred_check_branch
    %488 = sbr.rel (0) target = $region21
  $region20: #{resnet_forward.1} parent=0 // pred_region
    _
  $region21: #{resnet_forward.1} parent=0 // pred_fallthru
    _

</llo_original>
